<compile_context>
chip_gen: v6e
topology: v6e:2x2x1
jax: 0.10.0
libtpu: 0.0.40
codegen_flags: <defaults>
</compile_context>

<pallas_src>
import jax
import jax.numpy as jnp
from jax.experimental import pallas as pl
from jax.experimental.pallas import tpu as pltpu


def _attention_kernel(ws_ref, wd_ref, wh_ref, vb_ref,
                      s_ref, d_ref, dec_ref, mask_ref, out_ref):
    # ws_ref  : [H*S, H*S]  block-diag-in-S static weight   (compute dtype, resident)
    # wd_ref  : [H*S, H*S]  block-diag-in-S dynamic weight  (compute dtype, resident)
    # wh_ref  : [H,   H*S]  decoder weight w/ broadcast-over-S baked in (resident)
    # vb_ref  : [H*S, S]    block-diag-in-S v               (f32, resident)
    # s_ref   : [TB, H*S]   static embeddings (flattened)   (compute dtype)
    # d_ref   : [TB, H*S]   dynamic embeddings (flattened)  (compute dtype)
    # dec_ref : [TB, H]     decoder output                  (compute dtype)
    # mask_ref: [TB, S]     additive f32 mask (0 allowed / -inf forbidden)
    # out_ref : [TB, S]     f32 softmax logits
    #
    # u[b, h'*S + s] = sum_h Ws[h',h]*static[b,h,s]
    #                + sum_h Wd[h',h]*dyn[b,h,s]
    #                + sum_h Wh[h',h]*dec[b,h]          (bias, broadcast over s)
    u = jnp.dot(s_ref[...], ws_ref[...], preferred_element_type=jnp.float32)
    u = u + jnp.dot(d_ref[...], wd_ref[...], preferred_element_type=jnp.float32)
    u = u + jnp.dot(dec_ref[...], wh_ref[...], preferred_element_type=jnp.float32)

    a = jnp.tanh(u)                                              # [TB, H*S] f32 (EUP)

    # attns[b, s] = sum_h v[h] * a[b, h*S + s]   (tiny N=S MXU dot)
    attns = jnp.dot(a, vb_ref[...], preferred_element_type=jnp.float32)   # [TB, S]
    attns = attns + mask_ref[...]                                # additive 0 / -inf

    # Numerically-stable softmax over S (exact divide).
    m = jnp.max(attns, axis=-1, keepdims=True)
    e = jnp.exp(attns - m)
    out_ref[...] = (e / jnp.sum(e, axis=-1, keepdims=True)).astype(out_ref.dtype)


def _round_up(x, m):
    return ((x + m - 1) // m) * m


def _derive_tb(B):
    # Large tiles amortize the ~0.35us/step pipeline overhead and give dense
    # DMAs; cap=512 keeps the double-buffered footprint at a few MiB
    # (comfortably inside v7x's 64 MiB physical / 32 MiB scoped VMEM).
    # ceil(B/2) keeps the grid >= 2 when possible so the "parallel" batch axis
    # can be split across v7x's two TensorCores.
    return max(8, min(512, _round_up(pl.cdiv(B, 2), 8)))


def attention_forward(W, v, static_emb, dyn_emb, dec_out, mask, *,
                      compute_dtype=jnp.float32, tb=None):
    """
    W          : [1, H, 3H] float32 parameter
    v          : [1, 1, H]  float32 parameter
    static_emb : [B, H, S]
    dyn_emb    : [B, H, S]
    dec_out    : [B, 1, H]  (or [B, H])
    mask       : [B, S]     bool/int (True == forbidden)
    returns    : [B, S]     float32 softmax logits

    compute_dtype=jnp.bfloat16 halves embedding HBM traffic and is valid on
    v5e/v6e/v7x (MXU takes bf16 operands natively; tanh/softmax stay f32).
    """
    B, H, S = static_emb.shape
    HS = H * S

    # ---- parameters: split once and bake the per-s structure into tiny
    # block-diagonal weights (so the kernel is pure lane-dense matmuls). ----
    W2 = W.reshape(H, 3 * H).astype(jnp.float32)
    W_s, W_d, W_h = W2[:, :H], W2[:, H:2 * H], W2[:, 2 * H:]
    eye_s = jnp.eye(S, dtype=jnp.float32)

    def blockdiag(Wm):                       # [H_out, H_in] -> [H_in*S, H_out*S]
        return (Wm.T[:, None, :, None] * eye_s[None, :, None, :]).reshape(HS, HS)

    ws_big = blockdiag(W_s).astype(compute_dtype)                 # [H*S, H*S]
    wd_big = blockdiag(W_d).astype(compute_dtype)                 # [H*S, H*S]
    wh_big = jnp.repeat(W_h.T, S, axis=1).astype(compute_dtype)   # [H, H*S]
    v_big = (v.reshape(H)[:, None, None] * eye_s[None]).reshape(HS, S)  # f32

    # ---- activations: free row-major flattens, lane-dense last dims ------
    s_flat = static_emb.reshape(B, HS).astype(compute_dtype)      # [B, H*S]
    d_flat = dyn_emb.reshape(B, HS).astype(compute_dtype)         # [B, H*S]
    dec = dec_out.reshape(B, H).astype(compute_dtype)             # [B, H]
    addmask = jnp.where(mask.astype(bool), -jnp.inf, 0.0).astype(jnp.float32)

    # ---- batch tiling -----------------------------------------------------
    if tb is None:
        tb = _derive_tb(B)
    grid = pl.cdiv(B, tb)
    b_pad = grid * tb
    pad = b_pad - B
    if pad:
        s_flat = jnp.pad(s_flat, ((0, pad), (0, 0)))
        d_flat = jnp.pad(d_flat, ((0, pad), (0, 0)))
        dec = jnp.pad(dec, ((0, pad), (0, 0)))
        addmask = jnp.pad(addmask, ((0, pad), (0, 0)))   # padded rows = "allowed"

    out = pl.pallas_call(
        _attention_kernel,
        out_shape=jax.ShapeDtypeStruct((b_pad, S), jnp.float32),
        grid_spec=pltpu.PrefetchScalarGridSpec(
            num_scalar_prefetch=0,
            grid=(grid,),
            in_specs=[
                pl.BlockSpec((HS, HS), lambda i: (0, 0)),    # ws_big (resident)
                pl.BlockSpec((HS, HS), lambda i: (0, 0)),    # wd_big (resident)
                pl.BlockSpec((H, HS), lambda i: (0, 0)),     # wh_big (resident)
                pl.BlockSpec((HS, S), lambda i: (0, 0)),     # v_big  (resident)
                pl.BlockSpec((tb, HS), lambda i: (i, 0)),    # static  [TB, H*S]
                pl.BlockSpec((tb, HS), lambda i: (i, 0)),    # dynamic [TB, H*S]
                pl.BlockSpec((tb, H), lambda i: (i, 0)),     # decoder [TB, H]
                pl.BlockSpec((tb, S), lambda i: (i, 0)),     # add-mask [TB, S]
            ],
            out_specs=pl.BlockSpec((tb, S), lambda i: (i, 0)),
        ),
        compiler_params=pltpu.CompilerParams(
            dimension_semantics=("parallel",),               # batch: no accumulator
            vmem_limit_bytes=32 * 1024 * 1024),
    )(ws_big, wd_big, wh_big, v_big, s_flat, d_flat, dec, addmask)
    return out[:B]


def attention_reference(W, v, static_emb, dyn_emb, dec_out, mask):
    """Pure-JAX reference mirroring the PyTorch forward (high precision)."""
    B, H, S = static_emb.shape
    hidden_dec = jnp.broadcast_to(jnp.transpose(dec_out, (0, 2, 1)), (B, H, S))
    hidden = jnp.concatenate([static_emb, dyn_emb, hidden_dec], axis=1)   # [B,3H,S]
    Wb = jnp.broadcast_to(W, (B, H, 3 * H))
    vb = jnp.broadcast_to(v, (B, 1, H))
    u = jnp.einsum('bhk,bks->bhs', Wb, hidden, precision='highest')
    attns = jnp.einsum('bih,bhs->bis', vb, jnp.tanh(u),
                       precision='highest')[:, 0, :]
    attns = jnp.where(mask, -jnp.inf, attns)
    return jax.nn.softmax(attns, axis=1)


if __name__ == "__main__":
    B, H, S = 2, 32, 8

    key = jax.random.PRNGKey(0)
    kW, kv, ks, kd, kdec = jax.random.split(key, 5)

    # Deterministic parameter init (module declares zeros; zeros would make the
    # test degenerate, so use small random values — still deterministic).
    W = 0.1 * jax.random.normal(kW, (1, H, 3 * H), dtype=jnp.float32)
    v = 0.1 * jax.random.normal(kv, (1, 1, H), dtype=jnp.float32)

    static_emb = jax.random.normal(ks, (B, H, S), dtype=jnp.float32)
    dyn_emb = jax.random.normal(kd, (B, H, S), dtype=jnp.float32)
    dec_out = jax.random.normal(kdec, (B, 1, H), dtype=jnp.float32)

    # mask: True == forbidden; keep at least one allowed position per row
    mask = jnp.zeros((B, S), dtype=bool)
    mask = mask.at[0, 1].set(True).at[0, 5].set(True).at[1, 0].set(True)

    ref = attention_reference(W, v, static_emb, dyn_emb, dec_out, mask)

    # f32 path
    out = jax.block_until_ready(
        attention_forward(W, v, static_emb, dyn_emb, dec_out, mask))
    assert out.shape == (B, S)
    assert jnp.allclose(out, ref, atol=3e-3, rtol=3e-3), (out, ref)
    assert jnp.all(jnp.where(mask, out, 0.0) == 0.0)
    assert jnp.allclose(jnp.sum(out, axis=-1), 1.0, atol=1e-3)

    # bf16 MXU-operand path (valid on v5e/v6e/v7x): tanh/softmax stay f32
    out_bf16 = jax.block_until_ready(
        attention_forward(W, v, static_emb, dyn_emb, dec_out, mask,
                          compute_dtype=jnp.bfloat16))
    assert jnp.allclose(out_bf16, ref, atol=2e-2, rtol=2e-2), (out_bf16, ref)
    assert jnp.all(jnp.where(mask, out_bf16, 0.0) == 0.0)

    # Larger batch: exercises padding (B=20 -> B_pad=32), TB=16, grid=(2,)
    B2 = 20
    ks2, kd2, kdec2 = jax.random.split(jax.random.PRNGKey(1), 3)
    s2 = jax.random.normal(ks2, (B2, H, S), dtype=jnp.float32)
    d2 = jax.random.normal(kd2, (B2, H, S), dtype=jnp.float32)
    dec2 = jax.random.normal(kdec2, (B2, 1, H), dtype=jnp.float32)
    mask2 = jnp.zeros((B2, S), dtype=bool).at[:, 3].set(True)
    out2 = jax.block_until_ready(attention_forward(W, v, s2, d2, dec2, mask2))
    ref2 = attention_reference(W, v, s2, d2, dec2, mask2)
    assert out2.shape == (B2, S)
    assert jnp.allclose(out2, ref2, atol=3e-3, rtol=3e-3), (out2, ref2)
    assert jnp.all(jnp.where(mask2, out2, 0.0) == 0.0)

    print("KERNEL_OK")
</pallas_src>

<mosaic_0001>
module attributes {stable_mosaic.version = 11 : i64} {
  func.func @_attention_kernel(%arg0: i32, %arg1: memref<256x256xf32, #tpu.memory_space<vmem>>, %arg2: memref<256x256xf32, #tpu.memory_space<vmem>>, %arg3: memref<32x256xf32, #tpu.memory_space<vmem>>, %arg4: memref<256x8xf32, #tpu.memory_space<vmem>>, %arg5: memref<8x256xf32, #tpu.memory_space<vmem>>, %arg6: memref<8x256xf32, #tpu.memory_space<vmem>>, %arg7: memref<8x32xf32, #tpu.memory_space<vmem>>, %arg8: memref<8x8xf32, #tpu.memory_space<vmem>>, %arg9: memref<8x8xf32, #tpu.memory_space<vmem>>) attributes {dimension_semantics = [#tpu.dimension_semantics<parallel>], iteration_bounds = array<i64: 1>, scalar_prefetch = 0 : i64, scratch_operands = 0 : i64, tpu.core_type = #tpu.core_type<tc>, window_params = [{pipeline_mode = #tpu.pipeline_mode<synchronous>, transform_indices = @transform_0, window_bounds = array<i64: 256, 256>}, {pipeline_mode = #tpu.pipeline_mode<synchronous>, transform_indices = @transform_1, window_bounds = array<i64: 256, 256>}, {pipeline_mode = #tpu.pipeline_mode<synchronous>, transform_indices = @transform_2, window_bounds = array<i64: 32, 256>}, {pipeline_mode = #tpu.pipeline_mode<synchronous>, transform_indices = @transform_3, window_bounds = array<i64: 256, 8>}, {transform_indices = @transform_4, window_bounds = array<i64: 8, 256>}, {transform_indices = @transform_5, window_bounds = array<i64: 8, 256>}, {transform_indices = @transform_6, window_bounds = array<i64: 8, 32>}, {transform_indices = @transform_7, window_bounds = array<i64: 8, 8>}, {transform_indices = @transform_8, window_bounds = array<i64: 8, 8>}]} {
    %c0 = arith.constant 0 : index
    %c0_0 = arith.constant 0 : index
    %0 = vector.load %arg5[%c0, %c0_0] : memref<8x256xf32, #tpu.memory_space<vmem>>, vector<8x256xf32>
    %c0_1 = arith.constant 0 : index
    %c0_2 = arith.constant 0 : index
    %1 = vector.load %arg1[%c0_1, %c0_2] : memref<256x256xf32, #tpu.memory_space<vmem>>, vector<256x256xf32>
    %cst = arith.constant dense<0.000000e+00> : vector<8x256xf32>
    %2 = tpu.matmul %0, %1, %cst {dimension_numbers = #tpu.dot_dimension_numbers<[1], [0], [0], [1], [0, 0, 1, 1], [], []>} : vector<8x256xf32>, vector<256x256xf32>, vector<8x256xf32> -> vector<8x256xf32>
    %c0_3 = arith.constant 0 : index
    %c0_4 = arith.constant 0 : index
    %3 = vector.load %arg6[%c0_3, %c0_4] : memref<8x256xf32, #tpu.memory_space<vmem>>, vector<8x256xf32>
    %c0_5 = arith.constant 0 : index
    %c0_6 = arith.constant 0 : index
    %4 = vector.load %arg2[%c0_5, %c0_6] : memref<256x256xf32, #tpu.memory_space<vmem>>, vector<256x256xf32>
    %cst_7 = arith.constant dense<0.000000e+00> : vector<8x256xf32>
    %5 = tpu.matmul %3, %4, %cst_7 {dimension_numbers = #tpu.dot_dimension_numbers<[1], [0], [0], [1], [0, 0, 1, 1], [], []>} : vector<8x256xf32>, vector<256x256xf32>, vector<8x256xf32> -> vector<8x256xf32>
    %6 = arith.addf %2, %5 : vector<8x256xf32>
    %c0_8 = arith.constant 0 : index
    %c0_9 = arith.constant 0 : index
    %7 = vector.load %arg7[%c0_8, %c0_9] : memref<8x32xf32, #tpu.memory_space<vmem>>, vector<8x32xf32>
    %c0_10 = arith.constant 0 : index
    %c0_11 = arith.constant 0 : index
    %8 = vector.load %arg3[%c0_10, %c0_11] : memref<32x256xf32, #tpu.memory_space<vmem>>, vector<32x256xf32>
    %cst_12 = arith.constant dense<0.000000e+00> : vector<8x256xf32>
    %9 = tpu.matmul %7, %8, %cst_12 {dimension_numbers = #tpu.dot_dimension_numbers<[1], [0], [0], [1], [0, 0, 1, 1], [], []>} : vector<8x32xf32>, vector<32x256xf32>, vector<8x256xf32> -> vector<8x256xf32>
    %10 = arith.addf %6, %9 : vector<8x256xf32>
    %11 = math.tanh %10 : vector<8x256xf32>
    %c0_13 = arith.constant 0 : index
    %c0_14 = arith.constant 0 : index
    %12 = vector.load %arg4[%c0_13, %c0_14] : memref<256x8xf32, #tpu.memory_space<vmem>>, vector<256x8xf32>
    %cst_15 = arith.constant dense<0.000000e+00> : vector<8x8xf32>
    %13 = tpu.matmul %11, %12, %cst_15 {dimension_numbers = #tpu.dot_dimension_numbers<[1], [0], [0], [1], [0, 0, 1, 1], [], []>} : vector<8x256xf32>, vector<256x8xf32>, vector<8x8xf32> -> vector<8x8xf32>
    %c0_16 = arith.constant 0 : index
    %c0_17 = arith.constant 0 : index
    %14 = vector.load %arg8[%c0_16, %c0_17] : memref<8x8xf32, #tpu.memory_space<vmem>>, vector<8x8xf32>
    %15 = arith.addf %13, %14 : vector<8x8xf32>
    %cst_18 = arith.constant dense<0xFF800000> : vector<8xf32>
    %16 = vector.multi_reduction <maximumf>, %15, %cst_18 [1] : vector<8x8xf32> to vector<8xf32>
    %17 = vector.shape_cast %16 : vector<8xf32> to vector<8x1xf32>
    %18 = vector.broadcast %17 : vector<8x1xf32> to vector<8x8xf32>
    %19 = arith.subf %15, %18 : vector<8x8xf32>
    %20 = math.exp %19 : vector<8x8xf32>
    %cst_19 = arith.constant dense<0.000000e+00> : vector<8xf32>
    %21 = vector.multi_reduction <add>, %20, %cst_19 [1] : vector<8x8xf32> to vector<8xf32>
    %22 = vector.shape_cast %21 : vector<8xf32> to vector<8x1xf32>
    %23 = vector.broadcast %22 : vector<8x1xf32> to vector<8x8xf32>
    %24 = arith.divf %20, %23 : vector<8x8xf32>
    %c0_20 = arith.constant 0 : index
    %c0_21 = arith.constant 0 : index
    %25 = vector.load %arg9[%c0_20, %c0_21] : memref<8x8xf32, #tpu.memory_space<vmem>>, vector<8x8xf32>
    tpu.vector_store %arg9[%c0_20, %c0_21], %24 {strides = array<i32>} : memref<8x8xf32, #tpu.memory_space<vmem>>, vector<8x8xf32>,
    return
  }
  func.func @transform_0(%arg0: i32) -> (i32, i32) {
    %c0_i32 = arith.constant 0 : i32
    %c0_i32_0 = arith.constant 0 : i32
    %c0_i32_1 = arith.constant 0 : i32
    return %c0_i32, %c0_i32_0 : i32, i32
  }
  func.func @transform_1(%arg0: i32) -> (i32, i32) {
    %c0_i32 = arith.constant 0 : i32
    %c0_i32_0 = arith.constant 0 : i32
    %c0_i32_1 = arith.constant 0 : i32
    return %c0_i32, %c0_i32_0 : i32, i32
  }
  func.func @transform_2(%arg0: i32) -> (i32, i32) {
    %c0_i32 = arith.constant 0 : i32
    %c0_i32_0 = arith.constant 0 : i32
    %c0_i32_1 = arith.constant 0 : i32
    return %c0_i32, %c0_i32_0 : i32, i32
  }
  func.func @transform_3(%arg0: i32) -> (i32, i32) {
    %c0_i32 = arith.constant 0 : i32
    %c0_i32_0 = arith.constant 0 : i32
    %c0_i32_1 = arith.constant 0 : i32
    return %c0_i32, %c0_i32_0 : i32, i32
  }
  func.func @transform_4(%arg0: i32) -> (i32, i32) {
    %c0_i32 = arith.constant 0 : i32
    %c0_i32_0 = arith.constant 0 : i32
    return %arg0, %c0_i32 : i32, i32
  }
  func.func @transform_5(%arg0: i32) -> (i32, i32) {
    %c0_i32 = arith.constant 0 : i32
    %c0_i32_0 = arith.constant 0 : i32
    return %arg0, %c0_i32 : i32, i32
  }
  func.func @transform_6(%arg0: i32) -> (i32, i32) {
    %c0_i32 = arith.constant 0 : i32
    %c0_i32_0 = arith.constant 0 : i32
    return %arg0, %c0_i32 : i32, i32
  }
  func.func @transform_7(%arg0: i32) -> (i32, i32) {
    %c0_i32 = arith.constant 0 : i32
    %c0_i32_0 = arith.constant 0 : i32
    return %arg0, %c0_i32 : i32, i32
  }
  func.func @transform_8(%arg0: i32) -> (i32, i32) {
    %c0_i32 = arith.constant 0 : i32
    %c0_i32_0 = arith.constant 0 : i32
    return %arg0, %c0_i32 : i32, i32
  }
}

</mosaic_0001>

<llo_original>
// kernel: tpu_custom_call.1
$region0: #{tpu_custom_call.1}
  #allocation0 [shape = 'u32[]', space=smem, size = 0x4, offset = 0x4, fixed_abs, tag = 'smem constant byte address 0x4 - core index']
  #allocation1 [shape = 'u32[144,128]{1,0:T(1,128)}', space=vmem, size = 0x12000, scoped, tag = 'internal scratch']
  %s0 = inlined_call_operand.hbm [shape: f32[256,256], index: 0, kind: input, shape index: {}]
  %s1 = inlined_call_operand.hbm [shape: f32[256,256], index: 1, kind: input, shape index: {}]
  %s2 = inlined_call_operand.vmem [shape: f32[32,256], index: 2, kind: input, shape index: {}]
  %s3 = inlined_call_operand.vmem [shape: f32[256,8], index: 3, kind: input, shape index: {}]
  %s4 = inlined_call_operand.vmem [shape: f32[8,256], index: 4, kind: input, shape index: {}]
  %s5 = inlined_call_operand.vmem [shape: f32[8,256], index: 5, kind: input, shape index: {}]
  %s6 = inlined_call_operand.vmem [shape: f32[8,32], index: 6, kind: input, shape index: {}]
  %s7 = inlined_call_operand.vmem [shape: f32[8,8], index: 7, kind: input, shape index: {}]
  %s8 = inlined_call_operand.hbm [shape: f32[8,8], index: 8, kind: output, shape index: {}]
  %s9 = sld [smem:[#allocation0]]
  $region50: #{tpu_custom_call.1} parent=0
    _
  %s11 = ssub.s32 1, %s9
  %s12 = scalar_select 0, %s11, %s9
  $region1: #{tpu_custom_call.1} parent=0
    #allocation2 [shape = 'u8[262144]{0}', space=vmem, size = 0x40000, scoped, tag = 'input window, operand 0, single buffered']
    #allocation3 [shape = 's32[1]{0}', space=sflag, size = 0x4, scoped, tag = 'scoped memory for tpu_custom_call.1']
    #allocation4 [shape = 's32[1]{0}', space=sflag, size = 0x4, scoped, tag = 'scoped memory for tpu_custom_call.1']
    #allocation5 [shape = 'u8[262144]{0}', space=vmem, size = 0x40000, scoped, tag = 'input window, operand 1, single buffered']
    #allocation6 [shape = 's32[1]{0}', space=sflag, size = 0x4, scoped, tag = 'scoped memory for tpu_custom_call.1']
    #allocation7 [shape = 'u8[4096]{0}', space=vmem, size = 0x1000, scoped, tag = 'output window, operand 0, single buffered']
    %13 = vsyncpa [#allocation3], 0
    %14 = vsyncpa [#allocation6], 0
    %15 = vsyncpa [#allocation4], 0
    // Predicated region
    $region2: #{tpu_custom_call.1} parent=1 // pred_check
      _
    $region3: #{tpu_custom_call.1} parent=1 // pred_check_branch
      %17 = sbr.rel (0) target = $region5
    $region4: #{tpu_custom_call.1} parent=1 // pred_region
      %s19 = ssub.s32 8192, 8192
      %20 = vsyncadd [#allocation3], %s19
      %s21 = sshll.u32 [#allocation2], 4
      %s22 = int_to_ptr.vmem [resolvable:$true] %s21
      %27 = dma.hbm_to_vmem [thread:$0]  %s0, 8192, %s22, [#allocation3], 256, 256, 16
    $region5: #{tpu_custom_call.1} parent=1 // pred_fallthru
      _
    // Predicated region
    $region6: #{tpu_custom_call.1} parent=1 // pred_check
      _
    $region7: #{tpu_custom_call.1} parent=1 // pred_check_branch
      %29 = sbr.rel (0) target = $region9
    $region8: #{tpu_custom_call.1} parent=1 // pred_region
      %s31 = ssub.s32 8192, 8192
      %32 = vsyncadd [#allocation6], %s31
      %s33 = sshll.u32 [#allocation5], 4
      %s34 = int_to_ptr.vmem [resolvable:$true] %s33
      %39 = dma.hbm_to_vmem [thread:$0]  %s1, 8192, %s34, [#allocation6], 256, 256, 16
    $region9: #{tpu_custom_call.1} parent=1 // pred_fallthru
      _
    // Predicated region
    $region10: #{tpu_custom_call.1} parent=1 // pred_check
      _
    $region11: #{tpu_custom_call.1} parent=1 // pred_check_branch
      %41 = sbr.rel (0) target = $region13
    $region12: #{tpu_custom_call.1} parent=1 // pred_region
      _
    $region13: #{tpu_custom_call.1} parent=1 // pred_fallthru
      _
    // Predicated region
    $region14: #{tpu_custom_call.1} parent=1 // pred_check
      _
    $region15: #{tpu_custom_call.1} parent=1 // pred_check_branch
      %43 = sbr.rel (0) target = $region17
    $region16: #{tpu_custom_call.1} parent=1 // pred_region
      _
    $region17: #{tpu_custom_call.1} parent=1 // pred_fallthru
      _
    // Predicated region
    $region18: #{tpu_custom_call.1} parent=1 // pred_check
      _
    $region19: #{tpu_custom_call.1} parent=1 // pred_check_branch
      %45 = sbr.rel (0) target = $region21
    $region20: #{tpu_custom_call.1} parent=1 // pred_region
      _
    $region21: #{tpu_custom_call.1} parent=1 // pred_fallthru
      _
    // Predicated region
    $region22: #{tpu_custom_call.1} parent=1 // pred_check
      _
    $region23: #{tpu_custom_call.1} parent=1 // pred_check_branch
      %47 = sbr.rel (0) target = $region25
    $region24: #{tpu_custom_call.1} parent=1 // pred_region
      _
    $region25: #{tpu_custom_call.1} parent=1 // pred_fallthru
      _
    // Predicated region
    $region26: #{tpu_custom_call.1} parent=1 // pred_check
      _
    $region27: #{tpu_custom_call.1} parent=1 // pred_check_branch
      %49 = sbr.rel (0) target = $region29
    $region28: #{tpu_custom_call.1} parent=1 // pred_region
      _
    $region29: #{tpu_custom_call.1} parent=1 // pred_fallthru
      _
    // Predicated region
    $region30: #{tpu_custom_call.1} parent=1 // pred_check
      _
    $region31: #{tpu_custom_call.1} parent=1 // pred_check_branch
      %51 = sbr.rel (0) target = $region33
    $region32: #{tpu_custom_call.1} parent=1 // pred_region
      _
    $region33: #{tpu_custom_call.1} parent=1 // pred_fallthru
      _
    // Predicated region
    $region34: #{tpu_custom_call.1} parent=1 // pred_check
      _
    $region35: #{tpu_custom_call.1} parent=1 // pred_check_branch
      %53 = sbr.rel (0) target = $region37
    $region36: #{tpu_custom_call.1} parent=1 // pred_region
      %54 = dma.done [#allocation3], 8192
    $region37: #{tpu_custom_call.1} parent=1 // pred_fallthru
      _
    // Predicated region
    $region38: #{tpu_custom_call.1} parent=1 // pred_check
      _
    $region39: #{tpu_custom_call.1} parent=1 // pred_check_branch
      %56 = sbr.rel (0) target = $region41
    $region40: #{tpu_custom_call.1} parent=1 // pred_region
      %57 = dma.done [#allocation6], 8192
    $region41: #{tpu_custom_call.1} parent=1 // pred_fallthru
      _
    %v58 = vld [vmem:[%s4] sm:$0xff]
    %v59 = vld [vmem:[%s4 + $0x8] sm:$0xff]
    %v60 = vld [vmem:[#allocation2] sm:$0xff]
    %v61 = vld [vmem:[#allocation2 + $0x8] sm:$0xff]
    %v62 = vld [vmem:[#allocation2 + $0x10] sm:$0xff]
    %v63 = vld [vmem:[#allocation2 + $0x18] sm:$0xff]
    %v64 = vld [vmem:[#allocation2 + $0x20] sm:$0xff]
    %v65 = vld [vmem:[#allocation2 + $0x28] sm:$0xff]
    %v66 = vld [vmem:[#allocation2 + $0x30] sm:$0xff]
    %v67 = vld [vmem:[#allocation2 + $0x38] sm:$0xff]
    %v68 = vld [vmem:[#allocation2 + $0x40] sm:$0xff]
    %v69 = vld [vmem:[#allocation2 + $0x48] sm:$0xff]
    %v70 = vld [vmem:[#allocation2 + $0x50] sm:$0xff]
    %v71 = vld [vmem:[#allocation2 + $0x58] sm:$0xff]
    %v72 = vld [vmem:[#allocation2 + $0x60] sm:$0xff]
    %v73 = vld [vmem:[#allocation2 + $0x68] sm:$0xff]
    %v74 = vld [vmem:[#allocation2 + $0x70] sm:$0xff]
    %v75 = vld [vmem:[#allocation2 + $0x78] sm:$0xff]
    %v76 = vld [vmem:[#allocation2 + $0x80] sm:$0xff]
    %v77 = vld [vmem:[#allocation2 + $0x88] sm:$0xff]
    %v78 = vld [vmem:[#allocation2 + $0x90] sm:$0xff]
    %v79 = vld [vmem:[#allocation2 + $0x98] sm:$0xff]
    %v80 = vld [vmem:[#allocation2 + $0xa0] sm:$0xff]
    %v81 = vld [vmem:[#allocation2 + $0xa8] sm:$0xff]
    %v82 = vld [vmem:[#allocation2 + $0xb0] sm:$0xff]
    %v83 = vld [vmem:[#allocation2 + $0xb8] sm:$0xff]
    %v84 = vld [vmem:[#allocation2 + $0xc0] sm:$0xff]
    %v85 = vld [vmem:[#allocation2 + $0xc8] sm:$0xff]
    %v86 = vld [vmem:[#allocation2 + $0xd0] sm:$0xff]
    %v87 = vld [vmem:[#allocation2 + $0xd8] sm:$0xff]
    %v88 = vld [vmem:[#allocation2 + $0xe0] sm:$0xff]
    %v89 = vld [vmem:[#allocation2 + $0xe8] sm:$0xff]
    %v90 = vld [vmem:[#allocation2 + $0xf0] sm:$0xff]
    %v91 = vld [vmem:[#allocation2 + $0xf8] sm:$0xff]
    %v92 = vld [vmem:[#allocation2 + $0x100] sm:$0xff]
    %v93 = vld [vmem:[#allocation2 + $0x108] sm:$0xff]
    %v94 = vld [vmem:[#allocation2 + $0x110] sm:$0xff]
    %v95 = vld [vmem:[#allocation2 + $0x118] sm:$0xff]
    %v96 = vld [vmem:[#allocation2 + $0x120] sm:$0xff]
    %v97 = vld [vmem:[#allocation2 + $0x128] sm:$0xff]
    %v98 = vld [vmem:[#allocation2 + $0x130] sm:$0xff]
    %v99 = vld [vmem:[#allocation2 + $0x138] sm:$0xff]
    %v100 = vld [vmem:[#allocation2 + $0x140] sm:$0xff]
    %v101 = vld [vmem:[#allocation2 + $0x148] sm:$0xff]
    %v102 = vld [vmem:[#allocation2 + $0x150] sm:$0xff]
    %v103 = vld [vmem:[#allocation2 + $0x158] sm:$0xff]
    %v104 = vld [vmem:[#allocation2 + $0x160] sm:$0xff]
    %v105 = vld [vmem:[#allocation2 + $0x168] sm:$0xff]
    %v106 = vld [vmem:[#allocation2 + $0x170] sm:$0xff]
    %v107 = vld [vmem:[#allocation2 + $0x178] sm:$0xff]
    %v108 = vld [vmem:[#allocation2 + $0x180] sm:$0xff]
    %v109 = vld [vmem:[#allocation2 + $0x188] sm:$0xff]
    %v110 = vld [vmem:[#allocation2 + $0x190] sm:$0xff]
    %v111 = vld [vmem:[#allocation2 + $0x198] sm:$0xff]
    %v112 = vld [vmem:[#allocation2 + $0x1a0] sm:$0xff]
    %v113 = vld [vmem:[#allocation2 + $0x1a8] sm:$0xff]
    %v114 = vld [vmem:[#allocation2 + $0x1b0] sm:$0xff]
    %v115 = vld [vmem:[#allocation2 + $0x1b8] sm:$0xff]
    %v116 = vld [vmem:[#allocation2 + $0x1c0] sm:$0xff]
    %v117 = vld [vmem:[#allocation2 + $0x1c8] sm:$0xff]
    %v118 = vld [vmem:[#allocation2 + $0x1d0] sm:$0xff]
    %v119 = vld [vmem:[#allocation2 + $0x1d8] sm:$0xff]
    %v120 = vld [vmem:[#allocation2 + $0x1e0] sm:$0xff]
    %v121 = vld [vmem:[#allocation2 + $0x1e8] sm:$0xff]
    %v122 = vld [vmem:[#allocation2 + $0x1f0] sm:$0xff]
    %v123 = vld [vmem:[#allocation2 + $0x1f8] sm:$0xff]
    %v124 = vld [vmem:[%s5] sm:$0xff]
    %v125 = vld [vmem:[%s5 + $0x8] sm:$0xff]
    %v126 = vld [vmem:[#allocation5] sm:$0xff]
    %v127 = vld [vmem:[#allocation5 + $0x8] sm:$0xff]
    %v128 = vld [vmem:[#allocation5 + $0x10] sm:$0xff]
    %v129 = vld [vmem:[#allocation5 + $0x18] sm:$0xff]
    %v130 = vld [vmem:[#allocation5 + $0x20] sm:$0xff]
    %v131 = vld [vmem:[#allocation5 + $0x28] sm:$0xff]
    %v132 = vld [vmem:[#allocation5 + $0x30] sm:$0xff]
    %v133 = vld [vmem:[#allocation5 + $0x38] sm:$0xff]
    %v134 = vld [vmem:[#allocation5 + $0x40] sm:$0xff]
    %v135 = vld [vmem:[#allocation5 + $0x48] sm:$0xff]
    %v136 = vld [vmem:[#allocation5 + $0x50] sm:$0xff]
    %v137 = vld [vmem:[#allocation5 + $0x58] sm:$0xff]
    %v138 = vld [vmem:[#allocation5 + $0x60] sm:$0xff]
    %v139 = vld [vmem:[#allocation5 + $0x68] sm:$0xff]
    %v140 = vld [vmem:[#allocation5 + $0x70] sm:$0xff]
    %v141 = vld [vmem:[#allocation5 + $0x78] sm:$0xff]
    %v142 = vld [vmem:[#allocation5 + $0x80] sm:$0xff]
    %v143 = vld [vmem:[#allocation5 + $0x88] sm:$0xff]
    %v144 = vld [vmem:[#allocation5 + $0x90] sm:$0xff]
    %v145 = vld [vmem:[#allocation5 + $0x98] sm:$0xff]
    %v146 = vld [vmem:[#allocation5 + $0xa0] sm:$0xff]
    %v147 = vld [vmem:[#allocation5 + $0xa8] sm:$0xff]
    %v148 = vld [vmem:[#allocation5 + $0xb0] sm:$0xff]
    %v149 = vld [vmem:[#allocation5 + $0xb8] sm:$0xff]
    %v150 = vld [vmem:[#allocation5 + $0xc0] sm:$0xff]
    %v151 = vld [vmem:[#allocation5 + $0xc8] sm:$0xff]
    %v152 = vld [vmem:[#allocation5 + $0xd0] sm:$0xff]
    %v153 = vld [vmem:[#allocation5 + $0xd8] sm:$0xff]
    %v154 = vld [vmem:[#allocation5 + $0xe0] sm:$0xff]
    %v155 = vld [vmem:[#allocation5 + $0xe8] sm:$0xff]
    %v156 = vld [vmem:[#allocation5 + $0xf0] sm:$0xff]
    %v157 = vld [vmem:[#allocation5 + $0xf8] sm:$0xff]
    %v158 = vld [vmem:[#allocation5 + $0x100] sm:$0xff]
    %v159 = vld [vmem:[#allocation5 + $0x108] sm:$0xff]
    %v160 = vld [vmem:[#allocation5 + $0x110] sm:$0xff]
    %v161 = vld [vmem:[#allocation5 + $0x118] sm:$0xff]
    %v162 = vld [vmem:[#allocation5 + $0x120] sm:$0xff]
    %v163 = vld [vmem:[#allocation5 + $0x128] sm:$0xff]
    %v164 = vld [vmem:[#allocation5 + $0x130] sm:$0xff]
    %v165 = vld [vmem:[#allocation5 + $0x138] sm:$0xff]
    %v166 = vld [vmem:[#allocation5 + $0x140] sm:$0xff]
    %v167 = vld [vmem:[#allocation5 + $0x148] sm:$0xff]
    %v168 = vld [vmem:[#allocation5 + $0x150] sm:$0xff]
    %v169 = vld [vmem:[#allocation5 + $0x158] sm:$0xff]
    %v170 = vld [vmem:[#allocation5 + $0x160] sm:$0xff]
    %v171 = vld [vmem:[#allocation5 + $0x168] sm:$0xff]
    %v172 = vld [vmem:[#allocation5 + $0x170] sm:$0xff]
    %v173 = vld [vmem:[#allocation5 + $0x178] sm:$0xff]
    %v174 = vld [vmem:[#allocation5 + $0x180] sm:$0xff]
    %v175 = vld [vmem:[#allocation5 + $0x188] sm:$0xff]
    %v176 = vld [vmem:[#allocation5 + $0x190] sm:$0xff]
    %v177 = vld [vmem:[#allocation5 + $0x198] sm:$0xff]
    %v178 = vld [vmem:[#allocation5 + $0x1a0] sm:$0xff]
    %v179 = vld [vmem:[#allocation5 + $0x1a8] sm:$0xff]
    %v180 = vld [vmem:[#allocation5 + $0x1b0] sm:$0xff]
    %v181 = vld [vmem:[#allocation5 + $0x1b8] sm:$0xff]
    %v182 = vld [vmem:[#allocation5 + $0x1c0] sm:$0xff]
    %v183 = vld [vmem:[#allocation5 + $0x1c8] sm:$0xff]
    %v184 = vld [vmem:[#allocation5 + $0x1d0] sm:$0xff]
    %v185 = vld [vmem:[#allocation5 + $0x1d8] sm:$0xff]
    %v186 = vld [vmem:[#allocation5 + $0x1e0] sm:$0xff]
    %v187 = vld [vmem:[#allocation5 + $0x1e8] sm:$0xff]
    %v188 = vld [vmem:[#allocation5 + $0x1f0] sm:$0xff]
    %v189 = vld [vmem:[#allocation5 + $0x1f8] sm:$0xff]
    %190 = vmatprep.subr.mxu0 %v157
    %191 = vmatpush1.msra.mxu0 %v156
    %192 = vmatprep.subr.mxu0 %v155
    %193 = vmatpush1.msra.mxu0 %v154
    %194 = vmatprep.subr.mxu0 %v153
    %195 = vmatpush1.msra.mxu0 %v152
    %196 = vmatprep.subr.mxu0 %v151
    %197 = vmatpush1.msra.mxu0 %v150
    %198 = vmatprep.subr.mxu0 %v149
    %199 = vmatpush1.msra.mxu0 %v148
    %200 = vmatprep.subr.mxu0 %v147
    %201 = vmatpush1.msra.mxu0 %v146
    %202 = vmatprep.subr.mxu0 %v145
    %203 = vmatpush1.msra.mxu0 %v144
    %204 = vmatprep.subr.mxu0 %v143
    %205 = vmatpush1.msra.mxu0 %v142
    %206 = vmatprep.subr.mxu0 %v141
    %207 = vmatpush1.msra.mxu0 %v140
    %208 = vmatprep.subr.mxu0 %v139
    %209 = vmatpush1.msra.mxu0 %v138
    %210 = vmatprep.subr.mxu0 %v137
    %211 = vmatpush1.msra.mxu0 %v136
    %212 = vmatprep.subr.mxu0 %v135
    %213 = vmatpush1.msra.mxu0 %v134
    %214 = vmatprep.subr.mxu0 %v133
    %215 = vmatpush1.msra.mxu0 %v132
    %216 = vmatprep.subr.mxu0 %v131
    %217 = vmatpush1.msra.mxu0 %v130
    %218 = vmatprep.subr.mxu0 %v129
    %219 = vmatpush1.msra.mxu0 %v128
    %220 = vmatprep.subr.mxu0 %v127
    %221 = vmatpush1.msra.mxu0 %v126
    %222 = vmatprep.subr.mxu0 %v189
    %223 = vmatpush2.msra.mxu0 %v188
    %224 = vmatprep.subr.mxu0 %v187
    %225 = vmatpush2.msra.mxu0 %v186
    %226 = vmatprep.subr.mxu0 %v185
    %227 = vmatpush2.msra.mxu0 %v184
    %228 = vmatprep.subr.mxu0 %v183
    %229 = vmatpush2.msra.mxu0 %v182
    %230 = vmatprep.subr.mxu0 %v181
    %231 = vmatpush2.msra.mxu0 %v180
    %232 = vmatprep.subr.mxu0 %v179
    %233 = vmatpush2.msra.mxu0 %v178
    %234 = vmatprep.subr.mxu0 %v177
    %235 = vmatpush2.msra.mxu0 %v176
    %236 = vmatprep.subr.mxu0 %v175
    %237 = vmatpush2.msra.mxu0 %v174
    %238 = vmatprep.subr.mxu0 %v173
    %239 = vmatpush2.msra.mxu0 %v172
    %240 = vmatprep.subr.mxu0 %v171
    %241 = vmatpush2.msra.mxu0 %v170
    %242 = vmatprep.subr.mxu0 %v169
    %243 = vmatpush2.msra.mxu0 %v168
    %244 = vmatprep.subr.mxu0 %v167
    %245 = vmatpush2.msra.mxu0 %v166
    %246 = vmatprep.subr.mxu0 %v165
    %247 = vmatpush2.msra.mxu0 %v164
    %248 = vmatprep.subr.mxu0 %v163
    %249 = vmatpush2.msra.mxu0 %v162
    %250 = vmatprep.subr.mxu0 %v161
    %251 = vmatpush2.msra.mxu0 %v160
    %252 = vmatprep.subr.mxu0 %v159
    %253 = vmatpush2.msra.mxu0 %v158
    %254 = vmatprep.mubr.f32.mxu0 %v125
    %255 = vmatmul.mubr.f32.gmra.mxu0 %v124
    %v256 = vpop.f32.mrf.mxu0
    %v257 = vadd.f32 0.0, %v256
    %v258 = vpop.f32.mrf.mxu0
    %v259 = vadd.f32 0.0, %v258
    %260 = vdwg.mxu0
    %261 = vmatprep.subr.mxu0 %v91
    %262 = vmatpush1.msra.mxu0 %v90
    %263 = vmatprep.subr.mxu0 %v89
    %264 = vmatpush1.msra.mxu0 %v88
    %265 = vmatprep.subr.mxu0 %v87
    %266 = vmatpush1.msra.mxu0 %v86
    %267 = vmatprep.subr.mxu0 %v85
    %268 = vmatpush1.msra.mxu0 %v84
    %269 = vmatprep.subr.mxu0 %v83
    %270 = vmatpush1.msra.mxu0 %v82
    %271 = vmatprep.subr.mxu0 %v81
    %272 = vmatpush1.msra.mxu0 %v80
    %273 = vmatprep.subr.mxu0 %v79
    %274 = vmatpush1.msra.mxu0 %v78
    %275 = vmatprep.subr.mxu0 %v77
    %276 = vmatpush1.msra.mxu0 %v76
    %277 = vmatprep.subr.mxu0 %v75
    %278 = vmatpush1.msra.mxu0 %v74
    %279 = vmatprep.subr.mxu0 %v73
    %280 = vmatpush1.msra.mxu0 %v72
    %281 = vmatprep.subr.mxu0 %v71
    %282 = vmatpush1.msra.mxu0 %v70
    %283 = vmatprep.subr.mxu0 %v69
    %284 = vmatpush1.msra.mxu0 %v68
    %285 = vmatprep.subr.mxu0 %v67
    %286 = vmatpush1.msra.mxu0 %v66
    %287 = vmatprep.subr.mxu0 %v65
    %288 = vmatpush1.msra.mxu0 %v64
    %289 = vmatprep.subr.mxu0 %v63
    %290 = vmatpush1.msra.mxu0 %v62
    %291 = vmatprep.subr.mxu0 %v61
    %292 = vmatpush1.msra.mxu0 %v60
    %293 = vmatprep.subr.mxu0 %v123
    %294 = vmatpush2.msra.mxu0 %v122
    %295 = vmatprep.subr.mxu0 %v121
    %296 = vmatpush2.msra.mxu0 %v120
    %297 = vmatprep.subr.mxu0 %v119
    %298 = vmatpush2.msra.mxu0 %v118
    %299 = vmatprep.subr.mxu0 %v117
    %300 = vmatpush2.msra.mxu0 %v116
    %301 = vmatprep.subr.mxu0 %v115
    %302 = vmatpush2.msra.mxu0 %v114
    %303 = vmatprep.subr.mxu0 %v113
    %304 = vmatpush2.msra.mxu0 %v112
    %305 = vmatprep.subr.mxu0 %v111
    %306 = vmatpush2.msra.mxu0 %v110
    %307 = vmatprep.subr.mxu0 %v109
    %308 = vmatpush2.msra.mxu0 %v108
    %309 = vmatprep.subr.mxu0 %v107
    %310 = vmatpush2.msra.mxu0 %v106
    %311 = vmatprep.subr.mxu0 %v105
    %312 = vmatpush2.msra.mxu0 %v104
    %313 = vmatprep.subr.mxu0 %v103
    %314 = vmatpush2.msra.mxu0 %v102
    %315 = vmatprep.subr.mxu0 %v101
    %316 = vmatpush2.msra.mxu0 %v100
    %317 = vmatprep.subr.mxu0 %v99
    %318 = vmatpush2.msra.mxu0 %v98
    %319 = vmatprep.subr.mxu0 %v97
    %320 = vmatpush2.msra.mxu0 %v96
    %321 = vmatprep.subr.mxu0 %v95
    %322 = vmatpush2.msra.mxu0 %v94
    %323 = vmatprep.subr.mxu0 %v93
    %324 = vmatpush2.msra.mxu0 %v92
    %325 = vmatprep.mubr.f32.mxu0 %v59
    %326 = vmatmul.mubr.f32.gmra.mxu0 %v58
    %v327 = vpop.f32.mrf.mxu0
    %v328 = vadd.f32 %v257, %v327
    %v329 = vpop.f32.mrf.mxu0
    %v330 = vadd.f32 %v259, %v329
    %331 = vdwg.mxu0
    %v332 = vld [vmem:[%s6] sm:$0xff]
    %v333 = vld [vmem:[%s2] sm:$0xff]
    %v334 = vld [vmem:[%s2 + $0x8] sm:$0xff]
    %v335 = vld [vmem:[%s2 + $0x10] sm:$0xff]
    %v336 = vld [vmem:[%s2 + $0x18] sm:$0xff]
    %v337 = vld [vmem:[%s2 + $0x20] sm:$0xff]
    %v338 = vld [vmem:[%s2 + $0x28] sm:$0xff]
    %v339 = vld [vmem:[%s2 + $0x30] sm:$0xff]
    %v340 = vld [vmem:[%s2 + $0x38] sm:$0xff]
    %vm341 = vcmask 261120
    %v343 = vsel %vm341, %v332, 0
    %345 = vmatprep.subr.mxu0 0.0
    %346 = vmatpush1.msra.mxu0 0.0
    %347 = vmatprep.subr.mxu0 0.0
    %348 = vmatpush1.msra.mxu0 0.0
    %349 = vmatprep.subr.mxu0 0.0
    %350 = vmatpush1.msra.mxu0 0.0
    %351 = vmatprep.subr.mxu0 0.0
    %352 = vmatpush1.msra.mxu0 0.0
    %353 = vmatprep.subr.mxu0 0.0
    %354 = vmatpush1.msra.mxu0 0.0
    %355 = vmatprep.subr.mxu0 0.0
    %356 = vmatpush1.msra.mxu0 0.0
    %357 = vmatprep.subr.mxu0 0.0
    %358 = vmatpush1.msra.mxu0 0.0
    %359 = vmatprep.subr.mxu0 0.0
    %360 = vmatpush1.msra.mxu0 0.0
    %361 = vmatprep.subr.mxu0 0.0
    %362 = vmatpush1.msra.mxu0 0.0
    %363 = vmatprep.subr.mxu0 0.0
    %364 = vmatpush1.msra.mxu0 0.0
    %365 = vmatprep.subr.mxu0 0.0
    %366 = vmatpush1.msra.mxu0 0.0
    %367 = vmatprep.subr.mxu0 0.0
    %368 = vmatpush1.msra.mxu0 0.0
    %369 = vmatprep.subr.mxu0 %v340
    %370 = vmatpush1.msra.mxu0 %v339
    %371 = vmatprep.subr.mxu0 %v338
    %372 = vmatpush1.msra.mxu0 %v337
    %373 = vmatprep.subr.mxu0 %v336
    %374 = vmatpush1.msra.mxu0 %v335
    %375 = vmatprep.subr.mxu0 %v334
    %376 = vmatpush1.msra.mxu0 %v333
    %377 = vmatprep.subr.mxu0 0.0
    %378 = vmatpush2.msra.mxu0 0.0
    %379 = vmatprep.subr.mxu0 0.0
    %380 = vmatpush2.msra.mxu0 0.0
    %381 = vmatprep.subr.mxu0 0.0
    %382 = vmatpush2.msra.mxu0 0.0
    %383 = vmatprep.subr.mxu0 0.0
    %384 = vmatpush2.msra.mxu0 0.0
    %385 = vmatprep.subr.mxu0 0.0
    %386 = vmatpush2.msra.mxu0 0.0
    %387 = vmatprep.subr.mxu0 0.0
    %388 = vmatpush2.msra.mxu0 0.0
    %389 = vmatprep.subr.mxu0 0.0
    %390 = vmatpush2.msra.mxu0 0.0
    %391 = vmatprep.subr.mxu0 0.0
    %392 = vmatpush2.msra.mxu0 0.0
    %393 = vmatprep.subr.mxu0 0.0
    %394 = vmatpush2.msra.mxu0 0.0
    %395 = vmatprep.subr.mxu0 0.0
    %396 = vmatpush2.msra.mxu0 0.0
    %397 = vmatprep.subr.mxu0 0.0
    %398 = vmatpush2.msra.mxu0 0.0
    %399 = vmatprep.subr.mxu0 0.0
    %400 = vmatpush2.msra.mxu0 0.0
    %401 = vmatprep.subr.mxu0 0.0
    %402 = vmatpush2.msra.mxu0 0.0
    %403 = vmatprep.subr.mxu0 0.0
    %404 = vmatpush2.msra.mxu0 0.0
    %405 = vmatprep.subr.mxu0 0.0
    %406 = vmatpush2.msra.mxu0 0.0
    %407 = vmatprep.subr.mxu0 0.0
    %408 = vmatpush2.msra.mxu0 0.0
    %409 = vmatprep.mubr.f32.mxu0 0.0
    %410 = vmatmul.mubr.f32.gmra.mxu0 %v343
    %v411 = vpop.f32.mrf.mxu0
    %v412 = vadd.f32 0.0, %v411
    %v413 = vpop.f32.mrf.mxu0
    %v414 = vadd.f32 0.0, %v413
    %415 = vdwg.mxu0
    %v416 = vadd.f32 %v328, %v412
    %v417 = vadd.f32 %v330, %v414
    %v418 = vtanh.pop %v416
    %v419 = vtanh.pop %v417
    %v420 = vld [vmem:[%s3] sm:$0xff]
    %v421 = vld [vmem:[%s3 + $0x8] sm:$0xff]
    %v422 = vld [vmem:[%s3 + $0x10] sm:$0xff]
    %v423 = vld [vmem:[%s3 + $0x18] sm:$0xff]
    %v424 = vld [vmem:[%s3 + $0x20] sm:$0xff]
    %v425 = vld [vmem:[%s3 + $0x28] sm:$0xff]
    %v426 = vld [vmem:[%s3 + $0x30] sm:$0xff]
    %v427 = vld [vmem:[%s3 + $0x38] sm:$0xff]
    %v428 = vld [vmem:[%s3 + $0x40] sm:$0xff]
    %v429 = vld [vmem:[%s3 + $0x48] sm:$0xff]
    %v430 = vld [vmem:[%s3 + $0x50] sm:$0xff]
    %v431 = vld [vmem:[%s3 + $0x58] sm:$0xff]
    %v432 = vld [vmem:[%s3 + $0x60] sm:$0xff]
    %v433 = vld [vmem:[%s3 + $0x68] sm:$0xff]
    %v434 = vld [vmem:[%s3 + $0x70] sm:$0xff]
    %v435 = vld [vmem:[%s3 + $0x78] sm:$0xff]
    %v436 = vld [vmem:[%s3 + $0x80] sm:$0xff]
    %v437 = vld [vmem:[%s3 + $0x88] sm:$0xff]
    %v438 = vld [vmem:[%s3 + $0x90] sm:$0xff]
    %v439 = vld [vmem:[%s3 + $0x98] sm:$0xff]
    %v440 = vld [vmem:[%s3 + $0xa0] sm:$0xff]
    %v441 = vld [vmem:[%s3 + $0xa8] sm:$0xff]
    %v442 = vld [vmem:[%s3 + $0xb0] sm:$0xff]
    %v443 = vld [vmem:[%s3 + $0xb8] sm:$0xff]
    %v444 = vld [vmem:[%s3 + $0xc0] sm:$0xff]
    %v445 = vld [vmem:[%s3 + $0xc8] sm:$0xff]
    %v446 = vld [vmem:[%s3 + $0xd0] sm:$0xff]
    %v447 = vld [vmem:[%s3 + $0xd8] sm:$0xff]
    %v448 = vld [vmem:[%s3 + $0xe0] sm:$0xff]
    %v449 = vld [vmem:[%s3 + $0xe8] sm:$0xff]
    %v450 = vld [vmem:[%s3 + $0xf0] sm:$0xff]
    %v451 = vld [vmem:[%s3 + $0xf8] sm:$0xff]
    %v452 = vld [vmem:[%s7] sm:$0xff]
    %453 = vmatprep.subr.mxu0 0.0
    %454 = vmatpush1.msra.mxu0 %v435
    %455 = vmatprep.subr.mxu0 0.0
    %456 = vmatpush1.msra.mxu0 %v434
    %457 = vmatprep.subr.mxu0 0.0
    %458 = vmatpush1.msra.mxu0 %v433
    %459 = vmatprep.subr.mxu0 0.0
    %460 = vmatpush1.msra.mxu0 %v432
    %461 = vmatprep.subr.mxu0 0.0
    %462 = vmatpush1.msra.mxu0 %v431
    %463 = vmatprep.subr.mxu0 0.0
    %464 = vmatpush1.msra.mxu0 %v430
    %465 = vmatprep.subr.mxu0 0.0
    %466 = vmatpush1.msra.mxu0 %v429
    %467 = vmatprep.subr.mxu0 0.0
    %468 = vmatpush1.msra.mxu0 %v428
    %469 = vmatprep.subr.mxu0 0.0
    %470 = vmatpush1.msra.mxu0 %v427
    %471 = vmatprep.subr.mxu0 0.0
    %472 = vmatpush1.msra.mxu0 %v426
    %473 = vmatprep.subr.mxu0 0.0
    %474 = vmatpush1.msra.mxu0 %v425
    %475 = vmatprep.subr.mxu0 0.0
    %476 = vmatpush1.msra.mxu0 %v424
    %477 = vmatprep.subr.mxu0 0.0
    %478 = vmatpush1.msra.mxu0 %v423
    %479 = vmatprep.subr.mxu0 0.0
    %480 = vmatpush1.msra.mxu0 %v422
    %481 = vmatprep.subr.mxu0 0.0
    %482 = vmatpush1.msra.mxu0 %v421
    %483 = vmatprep.subr.mxu0 0.0
    %484 = vmatpush1.msra.mxu0 %v420
    %485 = vmatprep.subr.mxu0 0.0
    %486 = vmatpush2.msra.mxu0 %v451
    %487 = vmatprep.subr.mxu0 0.0
    %488 = vmatpush2.msra.mxu0 %v450
    %489 = vmatprep.subr.mxu0 0.0
    %490 = vmatpush2.msra.mxu0 %v449
    %491 = vmatprep.subr.mxu0 0.0
    %492 = vmatpush2.msra.mxu0 %v448
    %493 = vmatprep.subr.mxu0 0.0
    %494 = vmatpush2.msra.mxu0 %v447
    %495 = vmatprep.subr.mxu0 0.0
    %496 = vmatpush2.msra.mxu0 %v446
    %497 = vmatprep.subr.mxu0 0.0
    %498 = vmatpush2.msra.mxu0 %v445
    %499 = vmatprep.subr.mxu0 0.0
    %500 = vmatpush2.msra.mxu0 %v444
    %501 = vmatprep.subr.mxu0 0.0
    %502 = vmatpush2.msra.mxu0 %v443
    %503 = vmatprep.subr.mxu0 0.0
    %504 = vmatpush2.msra.mxu0 %v442
    %505 = vmatprep.subr.mxu0 0.0
    %506 = vmatpush2.msra.mxu0 %v441
    %507 = vmatprep.subr.mxu0 0.0
    %508 = vmatpush2.msra.mxu0 %v440
    %509 = vmatprep.subr.mxu0 0.0
    %510 = vmatpush2.msra.mxu0 %v439
    %511 = vmatprep.subr.mxu0 0.0
    %512 = vmatpush2.msra.mxu0 %v438
    %513 = vmatprep.subr.mxu0 0.0
    %514 = vmatpush2.msra.mxu0 %v437
    %515 = vmatprep.subr.mxu0 0.0
    %516 = vmatpush2.msra.mxu0 %v436
    %517 = vmatprep.mubr.f32.mxu0 %v419
    %518 = vmatmul.mubr.f32.gmra.mxu0 %v418
    %v519 = vpop.f32.mrf.mxu0
    %v520 = vadd.f32 %v452, %v519
    %v521 = vpop.f32.mrf.mxu0
    %522 = vdwg.mxu0
    %vm523 = vcmask 64512
    %v524 = vsel %vm523, %v520, -inf
    %525 = vmax.xlane.f32.xlu0 %v524
    %v526 = vpop.xlane.xlu0 %525
    %v527 = vsub.f32 %v520, %v526
    %v528 = vmul.f32 %v527, 1.442695
    %v529 = vpow.pop %v528
    %v530 = vsel %vm523, %v529, 0.0
    %531 = vadd.xlane.f32.xlu0 %v530
    %v532 = vpop.xlane.xlu0 %531
    %v533 = vrcp.pop %v532
    %v534 = vmul.f32 %v529, %v533
    %535 = vst.msk [vmem:[#allocation7] sm:$0xff] %vm523, %v534
    // Predicated region
    $region42: #{tpu_custom_call.1} parent=1 // pred_check
      _
    $region43: #{tpu_custom_call.1} parent=1 // pred_check_branch
      %537 = sbr.rel (0) target = $region45
    $region44: #{tpu_custom_call.1} parent=1 // pred_region
      %s539 = ssub.s32 128, 128
      %540 = vsyncadd [#allocation4], %s539
      %s542 = sshll.u32 [#allocation7], 4
      %s543 = int_to_ptr.vmem [resolvable:$true] %s542
      %545 = dma.vmem_to_hbm [thread:$0]  %s543, 128, %s8, [#allocation4]
    $region45: #{tpu_custom_call.1} parent=1 // pred_fallthru
      _
    // Predicated region
    $region46: #{tpu_custom_call.1} parent=1 // pred_check
      _
    $region47: #{tpu_custom_call.1} parent=1 // pred_check_branch
      %547 = sbr.rel (0) target = $region49
    $region48: #{tpu_custom_call.1} parent=1 // pred_region
      %548 = dma.done [#allocation4], 128
    $region49: #{tpu_custom_call.1} parent=1 // pred_fallthru
      _
    %549 = vsyncpa [#allocation3], 1
    %550 = vsyncpa [#allocation6], 1
    %551 = vsyncpa [#allocation4], 1

</llo_original>
